<compile_context>
chip_gen: v7x
topology: tpu7x:2x2x1
jax: 0.10.0
libtpu: 0.0.40
codegen_flags: <defaults>
</compile_context>

<pallas_src>
import functools

import jax
import jax.numpy as jnp
from jax import lax
from jax.experimental import pallas as pl
from jax.experimental.pallas import tpu as pltpu

GROUPS = 4
EPS_GN = 1e-5          # nn.GroupNorm default eps
NEG_SLOPE = 0.01       # LeakyReLU(0.01)


def _mask_adjust_kernel(H, W, HWp, x_ref, grp_ref, gamma_ref, beta_ref, w_ref,
                        alpha_ref, out_ref, ycol_ref):
    """One (B_TILE, C, HWp) slab of batch elements per grid step.

    x_ref:     (B, C, HWp) f32   flattened NCHW, spatial zero-padded to HWp lanes
    grp_ref:   (C, C)      f32   same-group aggregation matrix (resident input)
    gamma_ref: (C, 1)      f32
    beta_ref:  (C, 1)      f32
    w_ref:     (C, 9*C)    bf16  w_ref[o, (kh*3+kw)*C + c] == w[o, c, kh, kw]
    alpha_ref: (1,)        f32   SMEM scalar
    out_ref:   (B, C, HWp) f32
    ycol_ref:  (9*C, B*HWp) bf16 VMEM scratch (shared im2col matrix)
    """
    B, C, _ = x_ref.shape
    HW = H * W
    Cg = C // GROUPS
    inv_cnt = 1.0 / float(Cg * HW)
    P = W + 1                      # flat zero extension; covers every row/corner tap

    alpha = alpha_ref[0]

    # Static per-position masks on the flat (padded) spatial axis; shared by all samples.
    pidx = lax.broadcasted_iota(jnp.int32, (1, HWp), 1)
    widx = pidx % W
    ok_left = widx >= 1            # valid when the tap reads column w-1
    ok_right = widx <= W - 2       # valid when the tap reads column w+1
    valid = (pidx < HW) if HWp != HW else None

    zpad = jnp.zeros((C, P), jnp.bfloat16)

    for b in range(B):             # B is a small static constant -> unrolled
        xb = x_ref[b]                                        # (C, HWp) f32

        # ------------- GroupNorm(4, C): single pass (zero pad lanes add nothing) -------------
        s1 = jnp.sum(xb, axis=1, keepdims=True)              # (C, 1)
        s2 = jnp.sum(xb * xb, axis=1, keepdims=True)         # (C, 1)
        stats = jnp.concatenate([s1, s2], axis=1)            # (C, 2)
        # Resident same-group matrix: sums within a group and broadcasts back per channel.
        gstats = jnp.dot(grp_ref[...], stats, preferred_element_type=jnp.float32)
        mean_c = gstats[:, 0:1] * inv_cnt                    # (C, 1)
        # TODO(synk): E[x^2]-mean^2 in f32 can cancel for |mean| >> std inputs; subtract a
        # per-group pivot before the sums if that regime matters.
        var_c = jnp.maximum(gstats[:, 1:2] * inv_cnt - mean_c * mean_c, 0.0)
        rstd_c = lax.rsqrt(var_c + EPS_GN)
        scale_c = gamma_ref[...] * rstd_c                    # gamma * rstd
        shift_c = beta_ref[...] - mean_c * scale_c           # beta - mean * gamma * rstd

        y = xb * scale_c + shift_c                           # GN affine (lane broadcast)
        y = jnp.maximum(y, NEG_SLOPE * y)                    # LeakyReLU(0.01)
        if valid is not None:
            y = jnp.where(valid, y, 0.0)                     # zero lane pad (row edges read it)
        y = y.astype(jnp.bfloat16)                           # bf16-early: im2col is all bf16

        # ------------- 3x3 "same" conv: masked taps straight into the bf16 scratch -------------
        # ycol[(kh*3+kw)*C + c, b*HWp + p] = y[c, p + (kh-1)*W + (kw-1)]   (0 off-image)
        ycat = jnp.concatenate([zpad, y, zpad], axis=1)      # (C, HWp + 2P) bf16
        col0 = b * HWp
        for kh in range(3):
            for kw in range(3):
                s = (kh - 1) * W + (kw - 1)
                if s == 0:
                    tap = y                                  # center tap: no shift, no mask
                else:
                    tap = ycat[:, P + s:P + s + HWp]         # (C, HWp) shifted copy
                    if kw == 0:
                        tap = jnp.where(ok_left, tap, jnp.bfloat16(0))
                    elif kw == 2:
                        tap = jnp.where(ok_right, tap, jnp.bfloat16(0))
                ycol_ref[pl.ds((kh * 3 + kw) * C, C), pl.ds(col0, HWp)] = tap

    # ------------- One MXU matmul over every sample in the block -------------
    conv = jnp.dot(w_ref[...], ycol_ref[...],
                   preferred_element_type=jnp.float32)       # (C, B*HWp) f32

    for b in range(B):
        out_ref[b] = x_ref[b] + alpha * conv[:, b * HWp:(b + 1) * HWp]


def _pick_b_tile(N, C, HWp, budget_bytes=40 << 20):
    """Largest batch block fitting the VMEM budget while keeping >= 2 grid steps (v7x)."""
    per_sample = 48 * C * HWp   # f32 in/out (double-buffered) + bf16 im2col scratch + temps
    best = 1
    for d in range(1, N + 1):
        if N % d != 0:
            continue
        if d * per_sample > budget_bytes:
            continue
        if N // d >= 2 or N == 1:
            best = d
    return best


def mask_adjust_block(x_nchw, gamma, beta, w_sn_oihw, alpha, *, b_tile=None,
                      vmem_limit_bytes=48 << 20):
    """Forward pass of MaskAdjustBlock. x_nchw: (N, C, H, W) f32; returns same shape."""
    N, C, H, W = x_nchw.shape
    assert C % GROUPS == 0
    HW = H * W
    HWp = ((HW + 127) // 128) * 128          # lane-dense spatial axis

    x_flat = x_nchw.reshape(N, C, HW).astype(jnp.float32)
    if HWp != HW:
        x_flat = jnp.pad(x_flat, ((0, 0), (0, 0), (0, HWp - HW)))

    # (O,I,kh,kw) -> (O,kh,kw,I) -> (O, 9I); column (kh*3+kw)*C + c == w[o, c, kh, kw]
    w_mat = jnp.transpose(w_sn_oihw, (0, 2, 3, 1)).reshape(C, 9 * C).astype(jnp.bfloat16)
    gamma_c = gamma.reshape(C, 1).astype(jnp.float32)
    beta_c = beta.reshape(C, 1).astype(jnp.float32)
    alpha_a = jnp.asarray(alpha, jnp.float32).reshape(1)
    # Same-group aggregation matrix (resident; constant index_map => fetched once).
    gid = jnp.arange(C, dtype=jnp.int32) // (C // GROUPS)
    grp = (gid[:, None] == gid[None, :]).astype(jnp.float32)

    if b_tile is None:
        b_tile = _pick_b_tile(N, C, HWp)
    assert N % b_tile == 0
    grid_n = N // b_tile

    kernel = functools.partial(_mask_adjust_kernel, H, W, HWp)

    out_flat = pl.pallas_call(
        kernel,
        out_shape=jax.ShapeDtypeStruct((N, C, HWp), jnp.float32),
        grid=(grid_n,),
        in_specs=[
            pl.BlockSpec((b_tile, C, HWp), lambda n: (n, 0, 0)),
            pl.BlockSpec((C, C), lambda n: (0, 0)),          # resident params below:
            pl.BlockSpec((C, 1), lambda n: (0, 0)),          # constant block index =>
            pl.BlockSpec((C, 1), lambda n: (0, 0)),          # not re-fetched per step
            pl.BlockSpec((C, 9 * C), lambda n: (0, 0)),
            pl.BlockSpec(memory_space=pltpu.MemorySpace.SMEM),   # alpha scalar
        ],
        out_specs=pl.BlockSpec((b_tile, C, HWp), lambda n: (n, 0, 0)),
        scratch_shapes=[pltpu.VMEM((9 * C, b_tile * HWp), jnp.bfloat16)],
        compiler_params=pltpu.CompilerParams(
            dimension_semantics=("parallel",),     # shard batch blocks across TCs (v7x)
            vmem_limit_bytes=vmem_limit_bytes,     # explicit budget (v7x phys VMEM = 64 MiB)
        ),
    )(x_flat, grp, gamma_c, beta_c, w_mat, alpha_a)

    return out_flat[:, :, :HW].reshape(N, C, H, W)


def spectral_normalize(w_oihw, key, n_iter=1, eps=1e-12):
    """Parameter glue (plain JAX): one power iteration, PyTorch spectral_norm style."""
    cout = w_oihw.shape[0]
    w_matrix = w_oihw.reshape(cout, -1)
    u = jax.random.normal(key, (cout,), dtype=jnp.float32)
    u = u / jnp.maximum(jnp.linalg.norm(u), eps)
    v = u
    for _ in range(n_iter):
        v = w_matrix.T @ u
        v = v / jnp.maximum(jnp.linalg.norm(v), eps)
        u = w_matrix @ v
        u = u / jnp.maximum(jnp.linalg.norm(u), eps)
    sigma = u @ (w_matrix @ v)
    return w_oihw / sigma


def reference_forward(x, gamma, beta, w_sn, alpha):
    """Pure-JAX (f32) reference matching the PyTorch forward."""
    N, C, H, W = x.shape
    xg = x.reshape(N, GROUPS, C // GROUPS, H, W)
    mean = xg.mean(axis=(2, 3, 4), keepdims=True)
    var = ((xg - mean) ** 2).mean(axis=(2, 3, 4), keepdims=True)
    y = ((xg - mean) * jax.lax.rsqrt(var + EPS_GN)).reshape(N, C, H, W)
    y = y * gamma.reshape(1, C, 1, 1) + beta.reshape(1, C, 1, 1)
    y = jnp.where(y >= 0, y, NEG_SLOPE * y)
    conv = jax.lax.conv_general_dilated(
        y, w_sn, window_strides=(1, 1), padding=((1, 1), (1, 1)),
        dimension_numbers=("NCHW", "OIHW", "NCHW"))
    return x + alpha * conv


if __name__ == "__main__":
    def run_case(case_key, N, C, H, W):
        kx, kw, kg, kb, ku = jax.random.split(case_key, 5)
        x = jax.random.normal(kx, (N, C, H, W), dtype=jnp.float32)
        w_raw = jax.random.normal(kw, (C, C, 3, 3), dtype=jnp.float32) * 0.1
        gamma = 1.0 + 0.1 * jax.random.normal(kg, (C,), dtype=jnp.float32)
        beta = 0.1 * jax.random.normal(kb, (C,), dtype=jnp.float32)
        # Module init is alpha = 0.0; use a nonzero value so the conv branch is exercised.
        alpha = jnp.float32(0.5)
        w_sn = spectral_normalize(w_raw, ku)

        out = jax.block_until_ready(mask_adjust_block(x, gamma, beta, w_sn, alpha))
        ref = reference_forward(x, gamma, beta, w_sn, alpha)
        assert out.shape == (N, C, H, W)
        # Conv runs with bf16 MXU inputs + f32 accumulation -> small drift vs f32 reference.
        assert jnp.allclose(out, ref, atol=2e-2, rtol=2e-2), f"mismatch at {(N, C, H, W)}"

    key = jax.random.PRNGKey(0)
    k1, k2 = jax.random.split(key)
    run_case(k1, 2, 8, 16, 16)   # H*W = 256: already lane-dense
    run_case(k2, 2, 8, 12, 20)   # H != W, H*W = 240 -> padded to 256 lanes
    print("KERNEL_OK")
</pallas_src>

<mosaic_0001>
module attributes {stable_mosaic.version = 11 : i64} {
  func.func @_mask_adjust_kernel(%arg0: i32, %arg1: memref<1x8x256xf32, #tpu.memory_space<vmem>>, %arg2: memref<8x8xf32, #tpu.memory_space<vmem>>, %arg3: memref<8x1xf32, #tpu.memory_space<vmem>>, %arg4: memref<8x1xf32, #tpu.memory_space<vmem>>, %arg5: memref<8x72xbf16, #tpu.memory_space<vmem>>, %arg6: memref<1xf32, #tpu.memory_space<smem>>, %arg7: memref<1x8x256xf32, #tpu.memory_space<vmem>>, %arg8: memref<72x256xbf16, #tpu.memory_space<vmem>>) attributes {dimension_semantics = [#tpu.dimension_semantics<parallel>], iteration_bounds = array<i64: 2>, scalar_prefetch = 0 : i64, scratch_operands = 1 : i64, tpu.core_type = #tpu.core_type<tc>, window_params = [{transform_indices = @transform_0, window_bounds = array<i64: 1, 8, 256>}, {pipeline_mode = #tpu.pipeline_mode<synchronous>, transform_indices = @transform_1, window_bounds = array<i64: 8, 8>}, {pipeline_mode = #tpu.pipeline_mode<synchronous>, transform_indices = @transform_2, window_bounds = array<i64: 8, 1>}, {pipeline_mode = #tpu.pipeline_mode<synchronous>, transform_indices = @transform_3, window_bounds = array<i64: 8, 1>}, {pipeline_mode = #tpu.pipeline_mode<synchronous>, transform_indices = @transform_4, window_bounds = array<i64: 8, 72>}, {transform_indices = @transform_5, window_bounds = array<i64: 1>}, {transform_indices = @transform_6, window_bounds = array<i64: 1, 8, 256>}]} {
    %c0 = arith.constant 0 : index
    %0 = memref.load %arg6[%c0] : memref<1xf32, #tpu.memory_space<smem>>
    %1 = tpu.iota {dimensions = array<i32: 1>} : vector<1x256xi32>
    %c16_i32 = arith.constant 16 : i32
    %c0_i32 = arith.constant 0 : i32
    %2 = arith.cmpi eq, %c16_i32, %c0_i32 : i32
    %c1_i32 = arith.constant 1 : i32
    %3 = arith.select %2, %c1_i32, %c16_i32 : i32
    %4 = vector.broadcast %3 : i32 to vector<1x256xi32>
    %5 = arith.remsi %1, %4 : vector<1x256xi32>
    %c0_i32_0 = arith.constant 0 : i32
    %6 = vector.broadcast %c0_i32_0 : i32 to vector<1x256xi32>
    %7 = arith.cmpi ne, %5, %6 : vector<1x256xi32>
    %c0_i32_1 = arith.constant 0 : i32
    %8 = vector.broadcast %c0_i32_1 : i32 to vector<1x256xi32>
    %9 = arith.cmpi slt, %5, %8 : vector<1x256xi32>
    %c0_i32_2 = arith.constant 0 : i32
    %10 = arith.cmpi slt, %3, %c0_i32_2 : i32
    %11 = vector.broadcast %10 : i1 to vector<1x256xi1>
    %12 = vector.broadcast %11 : vector<1x256xi1> to vector<1x256xi1>
    %13 = arith.xori %9, %12 : vector<1x256xi1>
    %14 = arith.andi %13, %7 : vector<1x256xi1>
    %15 = vector.broadcast %3 : i32 to vector<1x256xi32>
    %16 = arith.addi %5, %15 : vector<1x256xi32>
    %17 = arith.select %14, %16, %5 : vector<1x256xi1>, vector<1x256xi32>
    %c1_i32_3 = arith.constant 1 : i32
    %18 = vector.broadcast %c1_i32_3 : i32 to vector<1x256xi32>
    %19 = arith.cmpi sge, %17, %18 : vector<1x256xi32>
    %c14_i32 = arith.constant 14 : i32
    %20 = vector.broadcast %c14_i32 : i32 to vector<1x256xi32>
    %21 = arith.cmpi sle, %17, %20 : vector<1x256xi32>
    %cst = arith.constant 0.000000e+00 : bf16
    %22 = vector.broadcast %cst : bf16 to vector<8x17xbf16>
    %c0_4 = arith.constant 0 : index
    %c0_5 = arith.constant 0 : index
    %c0_6 = arith.constant 0 : index
    %23 = vector.load %arg1[%c0_4, %c0_5, %c0_6] : memref<1x8x256xf32, #tpu.memory_space<vmem>>, vector<1x8x256xf32>
    %24 = vector.shape_cast %23 : vector<1x8x256xf32> to vector<8x256xf32>
    %cst_7 = arith.constant dense<0.000000e+00> : vector<8xf32>
    %25 = vector.multi_reduction <add>, %24, %cst_7 [1] : vector<8x256xf32> to vector<8xf32>
    %26 = vector.shape_cast %25 : vector<8xf32> to vector<8x1xf32>
    %27 = arith.mulf %24, %24 : vector<8x256xf32>
    %cst_8 = arith.constant dense<0.000000e+00> : vector<8xf32>
    %28 = vector.multi_reduction <add>, %27, %cst_8 [1] : vector<8x256xf32> to vector<8xf32>
    %29 = vector.shape_cast %28 : vector<8xf32> to vector<8x1xf32>
    %30 = tpu.concatenate %26, %29 in 1 : vector<8x1xf32>, vector<8x1xf32> -> vector<8x2xf32>
    %c0_9 = arith.constant 0 : index
    %c0_10 = arith.constant 0 : index
    %31 = vector.load %arg2[%c0_9, %c0_10] : memref<8x8xf32, #tpu.memory_space<vmem>>, vector<8x8xf32>
    %cst_11 = arith.constant dense<0.000000e+00> : vector<8x2xf32>
    %32 = tpu.matmul %31, %30, %cst_11 {dimension_numbers = #tpu.dot_dimension_numbers<[1], [0], [0], [1], [0, 0, 1, 1], [], []>} : vector<8x8xf32>, vector<8x2xf32>, vector<8x2xf32> -> vector<8x2xf32>
    %33 = vector.extract_strided_slice %32 {offsets = [0, 0], sizes = [8, 1], strides = [1, 1]} : vector<8x2xf32> to vector<8x1xf32>
    %cst_12 = arith.constant 0.001953125 : f32
    %34 = vector.broadcast %cst_12 : f32 to vector<8x1xf32>
    %35 = arith.mulf %33, %34 : vector<8x1xf32>
    %36 = vector.extract_strided_slice %32 {offsets = [0, 1], sizes = [8, 1], strides = [1, 1]} : vector<8x2xf32> to vector<8x1xf32>
    %cst_13 = arith.constant 0.001953125 : f32
    %37 = vector.broadcast %cst_13 : f32 to vector<8x1xf32>
    %38 = arith.mulf %36, %37 : vector<8x1xf32>
    %39 = arith.mulf %35, %35 : vector<8x1xf32>
    %40 = arith.subf %38, %39 : vector<8x1xf32>
    %cst_14 = arith.constant 0.000000e+00 : f32
    %41 = vector.broadcast %cst_14 : f32 to vector<8x1xf32>
    %42 = arith.maximumf %40, %41 : vector<8x1xf32>
    %cst_15 = arith.constant 9.99999974E-6 : f32
    %43 = vector.broadcast %cst_15 : f32 to vector<8x1xf32>
    %44 = arith.addf %42, %43 : vector<8x1xf32>
    %45 = math.rsqrt %44 : vector<8x1xf32>
    %c0_16 = arith.constant 0 : index
    %c0_17 = arith.constant 0 : index
    %46 = vector.load %arg3[%c0_16, %c0_17] : memref<8x1xf32, #tpu.memory_space<vmem>>, vector<8x1xf32>
    %47 = arith.mulf %46, %45 : vector<8x1xf32>
    %c0_18 = arith.constant 0 : index
    %c0_19 = arith.constant 0 : index
    %48 = vector.load %arg4[%c0_18, %c0_19] : memref<8x1xf32, #tpu.memory_space<vmem>>, vector<8x1xf32>
    %49 = arith.mulf %35, %47 : vector<8x1xf32>
    %50 = arith.subf %48, %49 : vector<8x1xf32>
    %51 = vector.broadcast %47 : vector<8x1xf32> to vector<8x256xf32>
    %52 = arith.mulf %24, %51 : vector<8x256xf32>
    %53 = vector.broadcast %50 : vector<8x1xf32> to vector<8x256xf32>
    %54 = arith.addf %52, %53 : vector<8x256xf32>
    %cst_20 = arith.constant 0.00999999977 : f32
    %55 = vector.broadcast %cst_20 : f32 to vector<8x256xf32>
    %56 = arith.mulf %55, %54 : vector<8x256xf32>
    %57 = arith.maximumf %54, %56 : vector<8x256xf32>
    %58 = arith.truncf %57 : vector<8x256xf32> to vector<8x256xbf16>
    %59 = tpu.concatenate %22, %58, %22 in 1 : vector<8x17xbf16>, vector<8x256xbf16>, vector<8x17xbf16> -> vector<8x290xbf16>
    %60 = vector.extract_strided_slice %59 {offsets = [0, 0], sizes = [8, 256], strides = [1, 1]} : vector<8x290xbf16> to vector<8x256xbf16>
    %cst_21 = arith.constant 0.000000e+00 : bf16
    %61 = vector.shape_cast %19 : vector<1x256xi1> to vector<1x256xi1>
    %62 = vector.broadcast %61 : vector<1x256xi1> to vector<8x256xi1>
    %63 = vector.broadcast %cst_21 : bf16 to vector<8x256xbf16>
    %64 = arith.select %62, %60, %63 : vector<8x256xi1>, vector<8x256xbf16>
    %c0_22 = arith.constant 0 : index
    %c0_23 = arith.constant 0 : index
    %65 = vector.load %arg8[%c0_22, %c0_23] : memref<72x256xbf16, #tpu.memory_space<vmem>>, vector<8x256xbf16>
    tpu.vector_store %arg8[%c0_22, %c0_23], %64 {strides = array<i32>} : memref<72x256xbf16, #tpu.memory_space<vmem>>, vector<8x256xbf16>,
    %66 = vector.extract_strided_slice %59 {offsets = [0, 1], sizes = [8, 256], strides = [1, 1]} : vector<8x290xbf16> to vector<8x256xbf16>
    %c8 = arith.constant 8 : index
    %c0_24 = arith.constant 0 : index
    %67 = vector.load %arg8[%c8, %c0_24] : memref<72x256xbf16, #tpu.memory_space<vmem>>, vector<8x256xbf16>
    tpu.vector_store %arg8[%c8, %c0_24], %66 {strides = array<i32>} : memref<72x256xbf16, #tpu.memory_space<vmem>>, vector<8x256xbf16>,
    %68 = vector.extract_strided_slice %59 {offsets = [0, 2], sizes = [8, 256], strides = [1, 1]} : vector<8x290xbf16> to vector<8x256xbf16>
    %cst_25 = arith.constant 0.000000e+00 : bf16
    %69 = vector.shape_cast %21 : vector<1x256xi1> to vector<1x256xi1>
    %70 = vector.broadcast %69 : vector<1x256xi1> to vector<8x256xi1>
    %71 = vector.broadcast %cst_25 : bf16 to vector<8x256xbf16>
    %72 = arith.select %70, %68, %71 : vector<8x256xi1>, vector<8x256xbf16>
    %c16 = arith.constant 16 : index
    %c0_26 = arith.constant 0 : index
    %73 = vector.load %arg8[%c16, %c0_26] : memref<72x256xbf16, #tpu.memory_space<vmem>>, vector<8x256xbf16>
    tpu.vector_store %arg8[%c16, %c0_26], %72 {strides = array<i32>} : memref<72x256xbf16, #tpu.memory_space<vmem>>, vector<8x256xbf16>,
    %74 = vector.extract_strided_slice %59 {offsets = [0, 16], sizes = [8, 256], strides = [1, 1]} : vector<8x290xbf16> to vector<8x256xbf16>
    %cst_27 = arith.constant 0.000000e+00 : bf16
    %75 = vector.shape_cast %19 : vector<1x256xi1> to vector<1x256xi1>
    %76 = vector.broadcast %75 : vector<1x256xi1> to vector<8x256xi1>
    %77 = vector.broadcast %cst_27 : bf16 to vector<8x256xbf16>
    %78 = arith.select %76, %74, %77 : vector<8x256xi1>, vector<8x256xbf16>
    %c24 = arith.constant 24 : index
    %c0_28 = arith.constant 0 : index
    %79 = vector.load %arg8[%c24, %c0_28] : memref<72x256xbf16, #tpu.memory_space<vmem>>, vector<8x256xbf16>
    tpu.vector_store %arg8[%c24, %c0_28], %78 {strides = array<i32>} : memref<72x256xbf16, #tpu.memory_space<vmem>>, vector<8x256xbf16>,
    %c32 = arith.constant 32 : index
    %c0_29 = arith.constant 0 : index
    %80 = vector.load %arg8[%c32, %c0_29] : memref<72x256xbf16, #tpu.memory_space<vmem>>, vector<8x256xbf16>
    tpu.vector_store %arg8[%c32, %c0_29], %58 {strides = array<i32>} : memref<72x256xbf16, #tpu.memory_space<vmem>>, vector<8x256xbf16>,
    %81 = vector.extract_strided_slice %59 {offsets = [0, 18], sizes = [8, 256], strides = [1, 1]} : vector<8x290xbf16> to vector<8x256xbf16>
    %cst_30 = arith.constant 0.000000e+00 : bf16
    %82 = vector.shape_cast %21 : vector<1x256xi1> to vector<1x256xi1>
    %83 = vector.broadcast %82 : vector<1x256xi1> to vector<8x256xi1>
    %84 = vector.broadcast %cst_30 : bf16 to vector<8x256xbf16>
    %85 = arith.select %83, %81, %84 : vector<8x256xi1>, vector<8x256xbf16>
    %c40 = arith.constant 40 : index
    %c0_31 = arith.constant 0 : index
    %86 = vector.load %arg8[%c40, %c0_31] : memref<72x256xbf16, #tpu.memory_space<vmem>>, vector<8x256xbf16>
    tpu.vector_store %arg8[%c40, %c0_31], %85 {strides = array<i32>} : memref<72x256xbf16, #tpu.memory_space<vmem>>, vector<8x256xbf16>,
    %87 = vector.extract_strided_slice %59 {offsets = [0, 32], sizes = [8, 256], strides = [1, 1]} : vector<8x290xbf16> to vector<8x256xbf16>
    %cst_32 = arith.constant 0.000000e+00 : bf16
    %88 = vector.shape_cast %19 : vector<1x256xi1> to vector<1x256xi1>
    %89 = vector.broadcast %88 : vector<1x256xi1> to vector<8x256xi1>
    %90 = vector.broadcast %cst_32 : bf16 to vector<8x256xbf16>
    %91 = arith.select %89, %87, %90 : vector<8x256xi1>, vector<8x256xbf16>
    %c48 = arith.constant 48 : index
    %c0_33 = arith.constant 0 : index
    %92 = vector.load %arg8[%c48, %c0_33] : memref<72x256xbf16, #tpu.memory_space<vmem>>, vector<8x256xbf16>
    tpu.vector_store %arg8[%c48, %c0_33], %91 {strides = array<i32>} : memref<72x256xbf16, #tpu.memory_space<vmem>>, vector<8x256xbf16>,
    %93 = vector.extract_strided_slice %59 {offsets = [0, 33], sizes = [8, 256], strides = [1, 1]} : vector<8x290xbf16> to vector<8x256xbf16>
    %c56 = arith.constant 56 : index
    %c0_34 = arith.constant 0 : index
    %94 = vector.load %arg8[%c56, %c0_34] : memref<72x256xbf16, #tpu.memory_space<vmem>>, vector<8x256xbf16>
    tpu.vector_store %arg8[%c56, %c0_34], %93 {strides = array<i32>} : memref<72x256xbf16, #tpu.memory_space<vmem>>, vector<8x256xbf16>,
    %95 = vector.extract_strided_slice %59 {offsets = [0, 34], sizes = [8, 256], strides = [1, 1]} : vector<8x290xbf16> to vector<8x256xbf16>
    %cst_35 = arith.constant 0.000000e+00 : bf16
    %96 = vector.shape_cast %21 : vector<1x256xi1> to vector<1x256xi1>
    %97 = vector.broadcast %96 : vector<1x256xi1> to vector<8x256xi1>
    %98 = vector.broadcast %cst_35 : bf16 to vector<8x256xbf16>
    %99 = arith.select %97, %95, %98 : vector<8x256xi1>, vector<8x256xbf16>
    %c64 = arith.constant 64 : index
    %c0_36 = arith.constant 0 : index
    %100 = vector.load %arg8[%c64, %c0_36] : memref<72x256xbf16, #tpu.memory_space<vmem>>, vector<8x256xbf16>
    tpu.vector_store %arg8[%c64, %c0_36], %99 {strides = array<i32>} : memref<72x256xbf16, #tpu.memory_space<vmem>>, vector<8x256xbf16>,
    %c0_37 = arith.constant 0 : index
    %c0_38 = arith.constant 0 : index
    %101 = vector.load %arg5[%c0_37, %c0_38] : memref<8x72xbf16, #tpu.memory_space<vmem>>, vector<8x72xbf16>
    %c0_39 = arith.constant 0 : index
    %c0_40 = arith.constant 0 : index
    %102 = vector.load %arg8[%c0_39, %c0_40] : memref<72x256xbf16, #tpu.memory_space<vmem>>, vector<72x256xbf16>
    %cst_41 = arith.constant dense<0.000000e+00> : vector<8x256xf32>
    %103 = tpu.matmul %101, %102, %cst_41 {dimension_numbers = #tpu.dot_dimension_numbers<[1], [0], [0], [1], [0, 0, 1, 1], [], []>} : vector<8x72xbf16>, vector<72x256xbf16>, vector<8x256xf32> -> vector<8x256xf32>
    %c0_42 = arith.constant 0 : index
    %c0_43 = arith.constant 0 : index
    %c0_44 = arith.constant 0 : index
    %104 = vector.load %arg1[%c0_42, %c0_43, %c0_44] : memref<1x8x256xf32, #tpu.memory_space<vmem>>, vector<1x8x256xf32>
    %105 = vector.shape_cast %104 : vector<1x8x256xf32> to vector<8x256xf32>
    %106 = vector.broadcast %0 : f32 to vector<8x256xf32>
    %107 = arith.mulf %106, %103 : vector<8x256xf32>
    %108 = arith.addf %105, %107 : vector<8x256xf32>
    %c0_45 = arith.constant 0 : index
    %c0_46 = arith.constant 0 : index
    %c0_47 = arith.constant 0 : index
    %109 = vector.load %arg7[%c0_45, %c0_46, %c0_47] : memref<1x8x256xf32, #tpu.memory_space<vmem>>, vector<1x8x256xf32>
    %110 = vector.shape_cast %109 : vector<1x8x256xf32> to vector<8x256xf32>
    %111 = vector.shape_cast %108 : vector<8x256xf32> to vector<1x8x256xf32>
    tpu.vector_store %arg7[%c0_45, %c0_46, %c0_47], %111 {strides = array<i32>} : memref<1x8x256xf32, #tpu.memory_space<vmem>>, vector<1x8x256xf32>,
    return
  }
  func.func @transform_0(%arg0: i32) -> (i32, i32, i32) {
    %c0_i32 = arith.constant 0 : i32
    %c0_i32_0 = arith.constant 0 : i32
    %c0_i32_1 = arith.constant 0 : i32
    return %arg0, %c0_i32, %c0_i32_0 : i32, i32, i32
  }
  func.func @transform_1(%arg0: i32) -> (i32, i32) {
    %c0_i32 = arith.constant 0 : i32
    %c0_i32_0 = arith.constant 0 : i32
    %c0_i32_1 = arith.constant 0 : i32
    return %c0_i32, %c0_i32_0 : i32, i32
  }
  func.func @transform_2(%arg0: i32) -> (i32, i32) {
    %c0_i32 = arith.constant 0 : i32
    %c0_i32_0 = arith.constant 0 : i32
    %c0_i32_1 = arith.constant 0 : i32
    return %c0_i32, %c0_i32_0 : i32, i32
  }
  func.func @transform_3(%arg0: i32) -> (i32, i32) {
    %c0_i32 = arith.constant 0 : i32
    %c0_i32_0 = arith.constant 0 : i32
    %c0_i32_1 = arith.constant 0 : i32
    return %c0_i32, %c0_i32_0 : i32, i32
  }
  func.func @transform_4(%arg0: i32) -> (i32, i32) {
    %c0_i32 = arith.constant 0 : i32
    %c0_i32_0 = arith.constant 0 : i32
    %c0_i32_1 = arith.constant 0 : i32
    return %c0_i32, %c0_i32_0 : i32, i32
  }
  func.func @transform_5(%arg0: i32) -> i32 {
    %c0_i32 = arith.constant 0 : i32
    %c0_i32_0 = arith.constant 0 : i32
    return %c0_i32 : i32
  }
  func.func @transform_6(%arg0: i32) -> (i32, i32, i32) {
    %c0_i32 = arith.constant 0 : i32
    %c0_i32_0 = arith.constant 0 : i32
    %c0_i32_1 = arith.constant 0 : i32
    return %arg0, %c0_i32, %c0_i32_0 : i32, i32, i32
  }
}

</mosaic_0001>

<llo_original>
// kernel: tpu_custom_call.1
$region0: #{tpu_custom_call.1}
  #allocation0 [shape = 'u32[]', space=smem, size = 0x4, offset = 0x4, fixed_abs, tag = 'smem constant byte address 0x4 - core index']
  #allocation1 [shape = 'u32[144,128]{1,0:T(1,128)}', space=vmem, size = 0x12000, scoped, tag = 'internal scratch']
  #allocation2 [shape = 'bf16[72,256]{1,0:T(8,128)(2,1)}', space=vmem, size = 0x9000, scoped, tag = 'scratch operand']
  #allocation3 [shape = 'f32[1]{0:T(128)S(6)}', space=smem, size = 0x200, scoped, tag = 'scoped memory for tpu_custom_call.1']
  %s0 = inlined_call_operand.hbm [shape: f32[2,8,256], index: 0, kind: input, shape index: {}]
  %s1 = inlined_call_operand.vmem [shape: f32[8,8], index: 1, kind: input, shape index: {}]
  %s2 = inlined_call_operand.vmem [shape: f32[8,1], index: 2, kind: input, shape index: {}]
  %s3 = inlined_call_operand.vmem [shape: f32[8,1], index: 3, kind: input, shape index: {}]
  %s4 = inlined_call_operand.vmem [shape: bf16[8,72], index: 4, kind: input, shape index: {}]
  %s5 = inlined_call_operand.<no memory space> [shape: f32[1], index: 5, kind: input, shape index: {}]
  %s6 = inlined_call_operand.hbm [shape: f32[2,8,256], index: 6, kind: output, shape index: {}]
  %s7 = sld [smem:[#allocation0]]
  $region61: #{tpu_custom_call.1} parent=0
    _
  %s9 = ssub.s32 1, %s7
  %s10 = scalar_select 0, %s9, %s7
  %11 = sst [smem:[#allocation3]] %s5
  $region1: #{tpu_custom_call.1} parent=0
    #allocation4 [shape = 'u8[16384]{0}', space=vmem, size = 0x4000, scoped, tag = 'input window, operand 0']
    #allocation5 [shape = 's32[2]{0}', space=sflag, size = 0x8, scoped, tag = 'scoped memory for tpu_custom_call.1']
    #allocation6 [shape = 's32[2]{0}', space=sflag, size = 0x8, scoped, tag = 'scoped memory for tpu_custom_call.1']
    #allocation7 [shape = 'u8[16384]{0}', space=vmem, size = 0x4000, scoped, tag = 'output window, operand 0']
    %12 = vsyncpa [#allocation5], 0
    %s13 = scalar_lea.sflag [#allocation5], 1
    %14 = vsyncpa %s13, 0
    %15 = vsyncpa [#allocation6], 0
    %s16 = scalar_lea.sflag [#allocation6], 1
    %17 = vsyncpa %s16, 0
    loop: start=0, step=1, limit=4
    $region2: #{tpu_custom_call.1} parent=1 // loop_pre_header
      _
    $region3: #{tpu_custom_call.1} parent=1 // loop_header
      %s19 = sphi 0, %s23
      %p20 = scmp.ge.s32.totalorder %s19, 4
      %s29 = sphi 0, %s31
      %s32 = sphi 0, %s29
      %s33 = sphi 0, %s32
      %s49 = sphi 0, %s33
      %s53 = sphi 0, %s53
      %s55 = sphi 0, %s53
      %s56 = sphi 0, %s55
      %s70 = sphi 0, %s56
      %s74 = sphi 0, %s74
      %s76 = sphi 0, %s74
      %s77 = sphi 0, %s76
      %s91 = sphi 0, %s77
      %s95 = sphi 0, %s95
      %s97 = sphi 0, %s95
      %s98 = sphi 0, %s97
      %s112 = sphi 0, %s98
      %s116 = sphi 0, %s116
      %s118 = sphi 0, %s116
      %s119 = sphi 0, %s118
      %s133 = sphi 0, %s119
      %s137 = sphi 0, %s137
      %s139 = sphi 0, %s137
      %s140 = sphi 0, %s139
      %s154 = sphi 0, %s140
      %s160 = sphi 0, %s162
      %s163 = sphi 0, %s160
      %s164 = sphi 0, %s163
      %s180 = sphi 0, %s164
    $region4: #{tpu_custom_call.1} parent=1 // loop_header_branch
      %22 = sbr.rel (%p20) target = $region8
    $region5: #{tpu_custom_call.1} parent=1 // loop_body
      %s24 = ssub.s32 %s19, 1
      %s25 = ssub.s32 %s19, 2
      %s26 = sadd.s32 %s19, 1
      %s27 = ssub.s32 %s19, %s26
      %p28 = scmp.eq.s32.totalorder %s27, 0
      %s30 = sadd.s32 %s29, 1
      %s31 = scalar_select %p28, %s29, %s30
      %p34 = pneg %p28
      %p35 = scmp.eq.s32.totalorder %s19, 1
      %p36 = por %p34, %p35
      %p37 = scmp.ne.s32.totalorder %s29, %s32
      %p38 = scmp.eq.s32.totalorder %s19, 0
      %p39 = por %p37, %p38
      %p40 = scmp.ne.s32.totalorder %s29, %s32
      %p41 = scmp.eq.s32.totalorder %s24, 1
      %p42 = por %p40, %p41
      %p43 = scmp.ne.s32.totalorder %s32, %s33
      %p44 = scmp.eq.s32.totalorder %s24, 0
      %p45 = por %p43, %p44
      %p46 = scmp.ne.s32.totalorder %s32, %s33
      %p47 = scmp.eq.s32.totalorder %s25, 1
      %p48 = por %p46, %p47
      %p50 = scmp.ne.s32.totalorder %s33, %s49
      %p51 = scmp.eq.s32.totalorder %s25, 0
      %p52 = por %p50, %p51
      %s54 = sadd.s32 %s53, 1
      %p57 = scmp.eq.s32.totalorder %s19, 1
      %p58 = scmp.ne.s32.totalorder %s53, %s55
      %p59 = scmp.eq.s32.totalorder %s19, 0
      %p60 = por %p58, %p59
      %p61 = scmp.ne.s32.totalorder %s53, %s55
      %p62 = scmp.eq.s32.totalorder %s24, 1
      %p63 = por %p61, %p62
      %p64 = scmp.ne.s32.totalorder %s55, %s56
      %p65 = scmp.eq.s32.totalorder %s24, 0
      %p66 = por %p64, %p65
      %p67 = scmp.ne.s32.totalorder %s55, %s56
      %p68 = scmp.eq.s32.totalorder %s25, 1
      %p69 = por %p67, %p68
      %p71 = scmp.ne.s32.totalorder %s56, %s70
      %p72 = scmp.eq.s32.totalorder %s25, 0
      %p73 = por %p71, %p72
      %s75 = sadd.s32 %s74, 1
      %p78 = scmp.eq.s32.totalorder %s19, 1
      %p79 = scmp.ne.s32.totalorder %s74, %s76
      %p80 = scmp.eq.s32.totalorder %s19, 0
      %p81 = por %p79, %p80
      %p82 = scmp.ne.s32.totalorder %s74, %s76
      %p83 = scmp.eq.s32.totalorder %s24, 1
      %p84 = por %p82, %p83
      %p85 = scmp.ne.s32.totalorder %s76, %s77
      %p86 = scmp.eq.s32.totalorder %s24, 0
      %p87 = por %p85, %p86
      %p88 = scmp.ne.s32.totalorder %s76, %s77
      %p89 = scmp.eq.s32.totalorder %s25, 1
      %p90 = por %p88, %p89
      %p92 = scmp.ne.s32.totalorder %s77, %s91
      %p93 = scmp.eq.s32.totalorder %s25, 0
      %p94 = por %p92, %p93
      %s96 = sadd.s32 %s95, 1
      %p99 = scmp.eq.s32.totalorder %s19, 1
      %p100 = scmp.ne.s32.totalorder %s95, %s97
      %p101 = scmp.eq.s32.totalorder %s19, 0
      %p102 = por %p100, %p101
      %p103 = scmp.ne.s32.totalorder %s95, %s97
      %p104 = scmp.eq.s32.totalorder %s24, 1
      %p105 = por %p103, %p104
      %p106 = scmp.ne.s32.totalorder %s97, %s98
      %p107 = scmp.eq.s32.totalorder %s24, 0
      %p108 = por %p106, %p107
      %p109 = scmp.ne.s32.totalorder %s97, %s98
      %p110 = scmp.eq.s32.totalorder %s25, 1
      %p111 = por %p109, %p110
      %p113 = scmp.ne.s32.totalorder %s98, %s112
      %p114 = scmp.eq.s32.totalorder %s25, 0
      %p115 = por %p113, %p114
      %s117 = sadd.s32 %s116, 1
      %p120 = scmp.eq.s32.totalorder %s19, 1
      %p121 = scmp.ne.s32.totalorder %s116, %s118
      %p122 = scmp.eq.s32.totalorder %s19, 0
      %p123 = por %p121, %p122
      %p124 = scmp.ne.s32.totalorder %s116, %s118
      %p125 = scmp.eq.s32.totalorder %s24, 1
      %p126 = por %p124, %p125
      %p127 = scmp.ne.s32.totalorder %s118, %s119
      %p128 = scmp.eq.s32.totalorder %s24, 0
      %p129 = por %p127, %p128
      %p130 = scmp.ne.s32.totalorder %s118, %s119
      %p131 = scmp.eq.s32.totalorder %s25, 1
      %p132 = por %p130, %p131
      %p134 = scmp.ne.s32.totalorder %s119, %s133
      %p135 = scmp.eq.s32.totalorder %s25, 0
      %p136 = por %p134, %p135
      %s138 = sadd.s32 %s137, 1
      %p141 = scmp.eq.s32.totalorder %s19, 1
      %p142 = scmp.ne.s32.totalorder %s137, %s139
      %p143 = scmp.eq.s32.totalorder %s19, 0
      %p144 = por %p142, %p143
      %p145 = scmp.ne.s32.totalorder %s137, %s139
      %p146 = scmp.eq.s32.totalorder %s24, 1
      %p147 = por %p145, %p146
      %p148 = scmp.ne.s32.totalorder %s139, %s140
      %p149 = scmp.eq.s32.totalorder %s24, 0
      %p150 = por %p148, %p149
      %p151 = scmp.ne.s32.totalorder %s139, %s140
      %p152 = scmp.eq.s32.totalorder %s25, 1
      %p153 = por %p151, %p152
      %p155 = scmp.ne.s32.totalorder %s140, %s154
      %p156 = scmp.eq.s32.totalorder %s25, 0
      %p157 = por %p155, %p156
      %s158 = ssub.s32 %s19, %s26
      %p159 = scmp.eq.s32.totalorder %s158, 0
      %s161 = sadd.s32 %s160, 1
      %s162 = scalar_select %p159, %s160, %s161
      %p165 = pneg %p159
      %p166 = scmp.eq.s32.totalorder %s19, 1
      %p167 = por %p165, %p166
      %p168 = scmp.ne.s32.totalorder %s160, %s163
      %p169 = scmp.eq.s32.totalorder %s19, 0
      %p170 = por %p168, %p169
      %p171 = scmp.ne.s32.totalorder %s160, %s163
      %p172 = scmp.eq.s32.totalorder %s24, 1
      %p173 = por %p171, %p172
      %p174 = scmp.ne.s32.totalorder %s163, %s164
      %p175 = scmp.eq.s32.totalorder %s24, 0
      %p176 = por %p174, %p175
      %p177 = scmp.ne.s32.totalorder %s163, %s164
      %p178 = scmp.eq.s32.totalorder %s25, 1
      %p179 = por %p177, %p178
      %p181 = scmp.ne.s32.totalorder %s164, %s180
      %p182 = scmp.eq.s32.totalorder %s25, 0
      %p183 = por %p181, %p182
      %p184 = scmp.le.s32.totalorder 1, %s19
      %p185 = scmp.lt.s32.totalorder %s19, 3
      %p186 = pnand %p184, %p185
      %p187 = pneg %p186
      // Predicated region
      $region9: #{tpu_custom_call.1} parent=5 // pred_check
        _
      $region10: #{tpu_custom_call.1} parent=5 // pred_check_branch
        %189 = sbr.rel (%p186) target = $region12
      $region11: #{tpu_custom_call.1} parent=5 // pred_region
        %s190 = ssub.s32 %s19, 1
        // Predicated region
        $region13: #{tpu_custom_call.1} parent=11 // pred_check
          %p191 = pneg %p66
        $region14: #{tpu_custom_call.1} parent=11 // pred_check_branch
          %193 = sbr.rel (%p191) target = $region16
        $region15: #{tpu_custom_call.1} parent=11 // pred_region
          _
        $region16: #{tpu_custom_call.1} parent=11 // pred_fallthru
          _
        // Predicated region
        $region17: #{tpu_custom_call.1} parent=11 // pred_check
          %p194 = pneg %p87
        $region18: #{tpu_custom_call.1} parent=11 // pred_check_branch
          %196 = sbr.rel (%p194) target = $region20
        $region19: #{tpu_custom_call.1} parent=11 // pred_region
          _
        $region20: #{tpu_custom_call.1} parent=11 // pred_fallthru
          _
        // Predicated region
        $region21: #{tpu_custom_call.1} parent=11 // pred_check
          %p197 = pneg %p108
        $region22: #{tpu_custom_call.1} parent=11 // pred_check_branch
          %199 = sbr.rel (%p197) target = $region24
        $region23: #{tpu_custom_call.1} parent=11 // pred_region
          _
        $region24: #{tpu_custom_call.1} parent=11 // pred_fallthru
          _
        // Predicated region
        $region25: #{tpu_custom_call.1} parent=11 // pred_check
          %p200 = pneg %p129
        $region26: #{tpu_custom_call.1} parent=11 // pred_check_branch
          %202 = sbr.rel (%p200) target = $region28
        $region27: #{tpu_custom_call.1} parent=11 // pred_region
          _
        $region28: #{tpu_custom_call.1} parent=11 // pred_fallthru
          _
        // Predicated region
        $region29: #{tpu_custom_call.1} parent=11 // pred_check
          %p203 = pneg %p150
        $region30: #{tpu_custom_call.1} parent=11 // pred_check_branch
          %205 = sbr.rel (%p203) target = $region32
        $region31: #{tpu_custom_call.1} parent=11 // pred_region
          _
        $region32: #{tpu_custom_call.1} parent=11 // pred_fallthru
          _
      $region12: #{tpu_custom_call.1} parent=5 // pred_fallthru
        _
      %p206 = scmp.lt.s32.totalorder %s19, 2
      // Predicated region
      $region33: #{tpu_custom_call.1} parent=5 // pred_check
        %p207 = pneg %p206
      $region34: #{tpu_custom_call.1} parent=5 // pred_check_branch
        %209 = sbr.rel (%p207) target = $region36
      $region35: #{tpu_custom_call.1} parent=5 // pred_region
        // Predicated region
        $region37: #{tpu_custom_call.1} parent=35 // pred_check
          %p210 = pneg %p39
        $region38: #{tpu_custom_call.1} parent=35 // pred_check_branch
          %212 = sbr.rel (%p210) target = $region40
        $region39: #{tpu_custom_call.1} parent=35 // pred_region
          %s213 = sand.u32 %s29, 1
          %s214 = scalar_lea.sflag [#allocation5], %s213
          %s215 = sand.u32 %s29, 1
          %s216 = smul.addr %s215, 16
          %s217 = scalar_lea.vmem [#allocation4], %s216
          %s219 = ssub.s32 256, 256
          %220 = vsyncadd %s214, %s219
          %s221 = smul.addr %s19, 2
          %s222 = smul.addr %s221, 128
          %s223 = scalar_lea.hbm %s0, %s222
          %s225 = sshll.u32 %s217, 4
          %s226 = int_to_ptr.vmem [resolvable:$true] %s225
          %228 = dma.hbm_to_vmem [thread:$0]  %s223, 256, %s226, %s214
        $region40: #{tpu_custom_call.1} parent=35 // pred_fallthru
          _
      $region36: #{tpu_custom_call.1} parent=5 // pred_fallthru
        _
      %p229 = scmp.le.s32.totalorder 1, %s19
      %p230 = scmp.lt.s32.totalorder %s19, 3
      %p231 = pnand %p229, %p230
      %p232 = pneg %p231
      // Predicated region
      $region41: #{tpu_custom_call.1} parent=5 // pred_check
        _
      $region42: #{tpu_custom_call.1} parent=5 // pred_check_branch
        %234 = sbr.rel (%p231) target = $region44
      $region43: #{tpu_custom_call.1} parent=5 // pred_region
        %s235 = ssub.s32 %s19, 1
        %s236 = sand.u32 %s32, 1
        %s237 = scalar_lea.sflag [#allocation5], %s236
        %s238 = sand.u32 %s32, 1
        %s239 = smul.addr %s238, 16
        %s240 = scalar_lea.vmem [#allocation4], %s239
        // Predicated region
        $region45: #{tpu_custom_call.1} parent=43 // pred_check
          %p241 = pneg %p45
        $region46: #{tpu_custom_call.1} parent=43 // pred_check_branch
          %243 = sbr.rel (%p241) target = $region48
        $region47: #{tpu_custom_call.1} parent=43 // pred_region
          %244 = dma.done %s237, 256
        $region48: #{tpu_custom_call.1} parent=43 // pred_fallthru
          _
        %s245 = sand.u32 %s32, 1
        %s246 = scalar_lea.sflag [#allocation5], %s245
        %s247 = sand.u32 %s32, 1
        %s248 = smul.addr %s247, 16
        %s249 = scalar_lea.vmem [#allocation4], %s248
        %p250 = pneg %p45
        %p251 = pneg %p42
        %p252 = pneg %p66
        %p253 = pneg %p63
        %p254 = pneg %p87
        %p255 = pneg %p84
        %p256 = pneg %p108
        %p257 = pneg %p105
        %p258 = pneg %p129
        %p259 = pneg %p126
        %p260 = pneg %p150
        %p261 = pneg %p147
        %p262 = pneg %p176
        %p263 = pneg %p173
        %s264 = sand.u32 %s163, 1
        %s265 = scalar_lea.sflag [#allocation6], %s264
        %s266 = sand.u32 %s163, 1
        %s267 = smul.addr %s266, 16
        %s268 = scalar_lea.vmem [#allocation7], %s267
        %s272 = sld [smem:[#allocation3]]
        %v273 = vlaneseq
        %v274 = vand.u32 %v273, 127
        %v275 = vadd.s32 %v274, 128
        %vm276 = vcmp.lt.s32.totalorder %v274, 0
        %v277 = vsub.s32 0, %v274
        %v278 = vsel %vm276, %v277, %v274
        %v279 = vshrl.u32 %v278, 4
        %v280 = vand.u32 %v278, 15
        %v281 = vsub.s32 0, %v280
        %v282 = vsel %vm276, %v281, %v280
        %vm283 = vcmp.lt.s32.totalorder %v275, 0
        %v284 = vsub.s32 0, %v275
        %v285 = vsel %vm283, %v284, %v275
        %v286 = vshrl.u32 %v285, 4
        %v287 = vand.u32 %v285, 15
        %v288 = vsub.s32 0, %v287
        %v289 = vsel %vm283, %v288, %v287
        %vm290 = vcmp.ne.s32.totalorder %v282, 0
        %vm291 = vcmp.ne.s32.totalorder %v289, 0
        %vm292 = vcmp.lt.s32.totalorder %v282, 0
        %vm293 = vcmp.lt.s32.totalorder %v289, 0
        %vm294 = vmand %vm292, %vm290
        %vm295 = vmand %vm293, %vm291
        %v296 = vadd.s32 %v282, 16
        %v297 = vadd.s32 %v289, 16
        %v298 = vsel %vm294, %v296, %v282
        %v299 = vsel %vm295, %v297, %v289
        %vm300 = vcmp.ge.s32.totalorder %v298, 1
        %vm301 = vcmp.ge.s32.totalorder %v299, 1
        %vm302 = vcmp.le.s32.totalorder %v298, 14
        %vm303 = vcmp.le.s32.totalorder %v299, 14
        %v304 = vld [vmem:[%s240] sm:$0xff]
        %v305 = vld [vmem:[%s240 + $0x8] sm:$0xff]
        %v306 = vadd.f32 %v304, %v305
        %307 = vadd.xlane.f32.xlu0 %v306
        %v308 = vpop.xlane.xlu0 %307
        %v309 = vmul.f32 %v304, %v304
        %v310 = vmul.f32 %v305, %v305
        %v311 = vadd.f32 %v309, %v310
        %312 = vadd.xlane.f32.xlu0 %v311
        %v313 = vpop.xlane.xlu0 %312
        %vm314 = vcmask 7168
        %v315 = vsel %vm314, %v308, %v313
        %v316 = vld [vmem:[%s1] sm:$0xff]
        %vm317 = vcmask 64512
        %v319 = vsel %vm317, %v316, 0
        %321 = vmatprep.subr.mxu0 0.0
        %322 = vmatpush1.msra.mxu0 %v315
        %323 = vmatprep.subr.mxu0 0.0
        %324 = vmatpush1.msra.mxu0 0.0
        %325 = vmatprep.subr.mxu0 0.0
        %326 = vmatpush1.msra.mxu0 0.0
        %327 = vmatprep.subr.mxu0 0.0
        %328 = vmatpush1.msra.mxu0 0.0
        %329 = vmatprep.subr.mxu0 0.0
        %330 = vmatpush1.msra.mxu0 0.0
        %331 = vmatprep.subr.mxu0 0.0
        %332 = vmatpush1.msra.mxu0 0.0
        %333 = vmatprep.subr.mxu0 0.0
        %334 = vmatpush1.msra.mxu0 0.0
        %335 = vmatprep.subr.mxu0 0.0
        %336 = vmatpush1.msra.mxu0 0.0
        %337 = vmatprep.subr.mxu0 0.0
        %338 = vmatpush1.msra.mxu0 0.0
        %339 = vmatprep.subr.mxu0 0.0
        %340 = vmatpush1.msra.mxu0 0.0
        %341 = vmatprep.subr.mxu0 0.0
        %342 = vmatpush1.msra.mxu0 0.0
        %343 = vmatprep.subr.mxu0 0.0
        %344 = vmatpush1.msra.mxu0 0.0
        %345 = vmatprep.subr.mxu0 0.0
        %346 = vmatpush1.msra.mxu0 0.0
        %347 = vmatprep.subr.mxu0 0.0
        %348 = vmatpush1.msra.mxu0 0.0
        %349 = vmatprep.subr.mxu0 0.0
        %350 = vmatpush1.msra.mxu0 0.0
        %351 = vmatprep.subr.mxu0 0.0
        %352 = vmatpush1.msra.mxu0 0.0
        %353 = vmatprep.subr.mxu0 0.0
        %354 = vmatpush1.msra.mxu0 0.0
        %355 = vmatprep.subr.mxu0 0.0
        %356 = vmatpush1.msra.mxu0 0.0
        %357 = vmatprep.subr.mxu0 0.0
        %358 = vmatpush1.msra.mxu0 0.0
        %359 = vmatprep.subr.mxu0 0.0
        %360 = vmatpush1.msra.mxu0 0.0
        %361 = vmatprep.subr.mxu0 0.0
        %362 = vmatpush1.msra.mxu0 0.0
        %363 = vmatprep.subr.mxu0 0.0
        %364 = vmatpush1.msra.mxu0 0.0
        %365 = vmatprep.subr.mxu0 0.0
        %366 = vmatpush1.msra.mxu0 0.0
        %367 = vmatprep.subr.mxu0 0.0
        %368 = vmatpush1.msra.mxu0 0.0
        %369 = vmatprep.subr.mxu0 0.0
        %370 = vmatpush1.msra.mxu0 0.0
        %371 = vmatprep.subr.mxu0 0.0
        %372 = vmatpush1.msra.mxu0 0.0
        %373 = vmatprep.subr.mxu0 0.0
        %374 = vmatpush1.msra.mxu0 0.0
        %375 = vmatprep.subr.mxu0 0.0
        %376 = vmatpush1.msra.mxu0 0.0
        %377 = vmatprep.subr.mxu0 0.0
        %378 = vmatpush1.msra.mxu0 0.0
        %379 = vmatprep.subr.mxu0 0.0
        %380 = vmatpush1.msra.mxu0 0.0
        %381 = vmatprep.subr.mxu0 0.0
        %382 = vmatpush1.msra.mxu0 0.0
        %383 = vmatprep.subr.mxu0 0.0
        %384 = vmatpush1.msra.mxu0 0.0
        %385 = vmatprep.mubr.f32.mxu0 0.0
        %386 = vmatmul.mubr.f32.gmra.mrb[0].mxu0 %v319
        %v387 = vpop.f32.mrb[0].mxu0
        %v388 = vadd.f32 0.0, %v387
        %v389 = vpop.f32.mrb[0].mxu0
        %390 = vdwg.mxu0
        %v391 = vmul.f32 %v388, 0.001953125
        %v392 = vmul.f32 %v391, %v391
        %394 = vrot.lane.b32.xlu0 %v392, 1
        %v395 = vpop.permute.xlu0 %394
        %v397 = vsub.f32 %v391, %v395
        %v398 = vmax.f32 %v397, 0.0
        %v399 = vadd.f32 %v398, 1e-05
        %v400 = vrsqrt.pop %v399
        %v401 = vld [vmem:[%s2] sm:$0xff]
        %403 = vrot.lane.b32.xlu0 %v400, 127
        %v404 = vpop.permute.xlu0 %403
        %v406 = vmul.f32 %v401, %v404
        %v407 = vld [vmem:[%s3] sm:$0xff]
        %v408 = vmul.f32 %v391, %v406
        %v409 = vsub.f32 %v407, %v408
        %411 = vset.pattern.permute.xlu0 0
        %412 = vperm.xlu0 %411, %v406
        %v413 = vpop.permute.xlu0 %412
        %v415 = vmul.f32 %v304, %v413
        %v416 = vmul.f32 %v305, %v413
        %418 = vset.pattern.permute.xlu0 0
        %419 = vperm.xlu0 %418, %v409
        %v420 = vpop.permute.xlu0 %419
        %v422 = vadd.f32 %v415, %v420
        %v423 = vadd.f32 %v416, %v420
        %v424 = vmul.f32 %v422, 0.01
        %v425 = vmul.f32 %v423, 0.01
        %v426 = vmax.f32 %v422, %v424
        %v427 = vmax.f32 %v423, %v425
        %v428 = vpack.c.bf16 %v426, %v426
        %v429 = vpack.c.bf16 %v427, %v427
        %432 = vrot.lane.b32.xlu0 %v428, 17
        %v433 = vpop.permute.xlu0 %432
        %434 = vrot.lane.b32.xlu0 %v429, 17
        %v435 = vpop.permute.xlu0 %434
        %vm436 = vcmask 138240
        %v437 = vsel %vm436, %v433, %v435
        %vm439 = vcmask 138240
        %v442 = vsel %vm439, 0, %v433
        %v445 = vsel %vm439, %v435, 0
        %v447 = vsel %vm300, 1, 0
        %v448 = vsel %vm301, 1, 0
        %vm449 = vcmp.eq.s32.totalorder %v447, 1
        %vm450 = vcmp.eq.s32.totalorder %v448, 1
        %vm451 = vmpackc.low %vm450, %vm449
        %v452 = vsel %vm451, 65537, 0
        %v453 = vlaneseq
        %v454 = vshrl.u32 %v453, 7
        %v455 = vsub.s32 0, %v454
        %v456 = vrot.slane %v452, %v455
        %v457 = vlaneseq
        %v458 = vshrl.u32 %v457, 7
        %v459 = vsub.s32 4, %v458
        %v460 = vrot.slane %v452, %v459
        %vm461 = vcmp.ne.s16.totalorder %v456, 0
        %vm462 = vcmp.ne.s16.totalorder %v460, 0
        %v463 = vsel %vm461, %v442, 0
        %v464 = vsel %vm462, %v437, 0
        %v467 = vunpack.c.l.b16 %v463
        %v468 = vunpack.c.l.b16 %v464
        %v469 = vpack.c.b16 %v468, %v467
        %471 = vst [vmem:[#allocation2] sm:$0xff] %v469
        %v474 = vunpack.c.l.b16 %v442
        %v475 = vunpack.c.l.b16 %v437
        %v476 = vunpack.c.l.b16 %v445
        %v477 = vpack.c.b16 %v475, %v474
        %v478 = vpack.c.b16 %v476, %v476
        %479 = vrot.lane.b32.xlu0 %v477, 127
        %v480 = vpop.permute.xlu0 %479
        %481 = vrot.lane.b32.xlu0 %v478, 127
        %v482 = vpop.permute.xlu0 %481
        %v483 = vrot.slane %v480, 4
        %v484 = vrot.slane %v482, 4
        %vm485 = vcmask 1043456
        %v486 = vsel %vm485, %v483, %v484
        %vm487 = vcmask 1039360
        %v488 = vsel %vm487, %v480, %v486
        %490 = vst [vmem:[#allocation2 + $0x8] sm:$0xff] %v488
        %v491 = vsel %vm302, 1, 0
        %v492 = vsel %vm303, 1, 0
        %vm493 = vcmp.eq.s32.totalorder %v491, 1
        %vm494 = vcmp.eq.s32.totalorder %v492, 1
        %vm495 = vmpackc.low %vm494, %vm493
        %v496 = vsel %vm495, 65537, 0
        %v497 = vlaneseq
        %v498 = vshrl.u32 %v497, 7
        %v499 = vsub.s32 0, %v498
        %v500 = vrot.slane %v496, %v499
        %v501 = vlaneseq
        %v502 = vshrl.u32 %v501, 7
        %v503 = vsub.s32 4, %v502
        %v504 = vrot.slane %v496, %v503
        %505 = vrot.lane.b32.xlu0 %v500, 2
        %v506 = vpop.permute.xlu0 %505
        %507 = vrot.lane.b32.xlu0 %v504, 2
        %v508 = vpop.permute.xlu0 %507
        %vm509 = vcmask 15360
        %v510 = vsel %vm509, %v506, %v508
        %vm511 = vcmp.ne.s16.totalorder %v506, 0
        %vm512 = vcmp.ne.s16.totalorder %v510, 0
        %vm513 = vcmp.ne.s16.totalorder %v508, 0
        %v514 = vsel %vm511, %v442, 0
        %v515 = vsel %vm512, %v437, 0
        %v516 = vsel %vm513, %v445, 0
        %v520 = vunpack.c.l.b16 %v514
        %v521 = vunpack.c.l.b16 %v515
        %v522 = vunpack.c.l.b16 %v516
        %v523 = vpack.c.b16 %v521, %v520
        %v524 = vpack.c.b16 %v522, %v522
        %525 = vrot.lane.b32.xlu0 %v523, 126
        %v526 = vpop.permute.xlu0 %525
        %527 = vrot.lane.b32.xlu0 %v524, 126
        %v528 = vpop.permute.xlu0 %527
        %v529 = vrot.slane %v526, 4
        %v530 = vrot.slane %v528, 4
        %v531 = vsel %vm485, %v529, %v530
        %vm532 = vcmask 1031168
        %v533 = vsel %vm532, %v526, %v531
        %535 = vst [vmem:[#allocation2 + $0x10] sm:$0xff] %v533
        %536 = vrot.lane.b32.xlu0 %v456, 16
        %v537 = vpop.permute.xlu0 %536
        %538 = vrot.lane.b32.xlu0 %v460, 16
        %v539 = vpop.permute.xlu0 %538
        %vm540 = vcmask 130048
        %v541 = vsel %vm540, %v537, %v539
        %vm542 = vcmp.ne.s16.totalorder %v537, 0
        %vm543 = vcmp.ne.s16.totalorder %v541, 0
        %vm544 = vcmp.ne.s16.totalorder %v539, 0
        %v545 = vsel %vm542, %v442, 0
        %v546 = vsel %vm543, %v437, 0
        %v547 = vsel %vm544, %v445, 0
        %v551 = vunpack.c.l.b16 %v545
        %v552 = vunpack.c.l.b16 %v546
        %v553 = vunpack.c.l.b16 %v547
        %v554 = vpack.c.b16 %v552, %v551
        %v555 = vpack.c.b16 %v553, %v553
        %556 = vrot.lane.b32.xlu0 %v554, 112
        %v557 = vpop.permute.xlu0 %556
        %558 = vrot.lane.b32.xlu0 %v555, 112
        %v559 = vpop.permute.xlu0 %558
        %v560 = vrot.slane %v557, 4
        %v561 = vrot.slane %v559, 4
        %v562 = vsel %vm485, %v560, %v561
        %vm563 = vcmask 916480
        %v564 = vsel %vm563, %v557, %v562
        %566 = vst [vmem:[#allocation2 + $0x18] sm:$0xff] %v564
        %v567 = vunpack.c.l.b16 %v428
        %v568 = vunpack.c.l.b16 %v429
        %v569 = vpack.c.b16 %v568, %v567
        %571 = vst [vmem:[#allocation2 + $0x20] sm:$0xff] %v569
        %572 = vrot.lane.b32.xlu0 %v500, 18
        %v573 = vpop.permute.xlu0 %572
        %574 = vrot.lane.b32.xlu0 %v504, 18
        %v575 = vpop.permute.xlu0 %574
        %vm576 = vcmask 146432
        %v577 = vsel %vm576, %v573, %v575
        %vm578 = vcmp.ne.s16.totalorder %v573, 0
        %vm579 = vcmp.ne.s16.totalorder %v577, 0
        %vm580 = vcmp.ne.s16.totalorder %v575, 0
        %v581 = vsel %vm578, %v442, 0
        %v582 = vsel %vm579, %v437, 0
        %v583 = vsel %vm580, %v445, 0
        %v587 = vunpack.c.l.b16 %v581
        %v588 = vunpack.c.l.b16 %v582
        %v589 = vunpack.c.l.b16 %v583
        %v590 = vpack.c.b16 %v588, %v587
        %v591 = vpack.c.b16 %v589, %v589
        %592 = vrot.lane.b32.xlu0 %v590, 110
        %v593 = vpop.permute.xlu0 %592
        %594 = vrot.lane.b32.xlu0 %v591, 110
        %v595 = vpop.permute.xlu0 %594
        %v596 = vrot.slane %v593, 4
        %v597 = vrot.slane %v595, 4
        %v598 = vsel %vm485, %v596, %v597
        %vm599 = vcmask 900096
        %v600 = vsel %vm599, %v593, %v598
        %602 = vst [vmem:[#allocation2 + $0x28] sm:$0xff] %v600
        %603 = vrot.lane.b32.xlu0 %v456, 32
        %v604 = vpop.permute.xlu0 %603
        %605 = vrot.lane.b32.xlu0 %v460, 32
        %v606 = vpop.permute.xlu0 %605
        %vm607 = vcmask 261120
        %v608 = vsel %vm607, %v604, %v606
        %vm609 = vcmp.ne.s16.totalorder %v604, 0
        %vm610 = vcmp.ne.s16.totalorder %v608, 0
        %vm611 = vcmp.ne.s16.totalorder %v606, 0
        %v612 = vsel %vm609, %v442, 0
        %v613 = vsel %vm610, %v437, 0
        %v614 = vsel %vm611, %v445, 0
        %v618 = vunpack.c.l.b16 %v612
        %v619 = vunpack.c.l.b16 %v613
        %v620 = vunpack.c.l.b16 %v614
        %v621 = vpack.c.b16 %v619, %v618
        %v622 = vpack.c.b16 %v620, %v620
        %623 = vrot.lane.b32.xlu0 %v621, 96
        %v624 = vpop.permute.xlu0 %623
        %625 = vrot.lane.b32.xlu0 %v622, 96
        %v626 = vpop.permute.xlu0 %625
        %v627 = vrot.slane %v624, 4
        %v628 = vrot.slane %v626, 4
        %v629 = vsel %vm485, %v627, %v628
        %vm630 = vcmask 785408
        %v631 = vsel %vm630, %v624, %v629
        %633 = vst [vmem:[#allocation2 + $0x30] sm:$0xff] %v631
        %634 = vrot.lane.b32.xlu0 %v477, 95
        %v635 = vpop.permute.xlu0 %634
        %636 = vrot.lane.b32.xlu0 %v478, 95
        %v637 = vpop.permute.xlu0 %636
        %v638 = vrot.slane %v635, 4
        %v639 = vrot.slane %v637, 4
        %v640 = vsel %vm485, %v638, %v639
        %vm641 = vcmask 777216
        %v642 = vsel %vm641, %v635, %v640
        %644 = vst [vmem:[#allocation2 + $0x38] sm:$0xff] %v642
        %645 = vrot.lane.b32.xlu0 %v500, 34
        %v646 = vpop.permute.xlu0 %645
        %647 = vrot.lane.b32.xlu0 %v504, 34
        %v648 = vpop.permute.xlu0 %647
        %vm649 = vcmask 277504
        %v650 = vsel %vm649, %v646, %v648
        %vm651 = vcmp.ne.s16.totalorder %v646, 0
        %vm652 = vcmp.ne.s16.totalorder %v650, 0
        %vm653 = vcmp.ne.s16.totalorder %v648, 0
        %v654 = vsel %vm651, %v442, 0
        %v655 = vsel %vm652, %v437, 0
        %v656 = vsel %vm653, %v445, 0
        %v660 = vunpack.c.l.b16 %v654
        %v661 = vunpack.c.l.b16 %v655
        %v662 = vunpack.c.l.b16 %v656
        %v663 = vpack.c.b16 %v661, %v660
        %v664 = vpack.c.b16 %v662, %v662
        %665 = vrot.lane.b32.xlu0 %v663, 94
        %v666 = vpop.permute.xlu0 %665
        %667 = vrot.lane.b32.xlu0 %v664, 94
        %v668 = vpop.permute.xlu0 %667
        %v669 = vrot.slane %v666, 4
        %v670 = vrot.slane %v668, 4
        %v671 = vsel %vm485, %v669, %v670
        %vm672 = vcmask 769024
        %v673 = vsel %vm672, %v666, %v671
        %675 = vst [vmem:[#allocation2 + $0x40] sm:$0xff] %v673
        %v676 = vld [vmem:[%s4] sm:$0xf]
        %v677 = vld [vmem:[#allocation2] sm:$0xff]
        %v678 = vld [vmem:[#allocation2 + $0x8] sm:$0xff]
        %v679 = vld [vmem:[#allocation2 + $0x10] sm:$0xff]
        %v680 = vld [vmem:[#allocation2 + $0x18] sm:$0xff]
        %v681 = vld [vmem:[#allocation2 + $0x20] sm:$0xff]
        %v682 = vld [vmem:[#allocation2 + $0x28] sm:$0xff]
        %v683 = vld [vmem:[#allocation2 + $0x30] sm:$0xff]
        %v684 = vld [vmem:[#allocation2 + $0x38] sm:$0xff]
        %v685 = vld [vmem:[#allocation2 + $0x40] sm:$0xff]
        %v695 = vunpack.c.l.b16 %v677
        %v696 = vunpack.c.h.b16 %v677
        %v697 = vunpack.c.l.b16 %v678
        %v698 = vunpack.c.h.b16 %v678
        %v699 = vunpack.c.l.b16 %v679
        %v700 = vunpack.c.h.b16 %v679
        %v701 = vunpack.c.l.b16 %v680
        %v702 = vunpack.c.h.b16 %v680
        %v703 = vunpack.c.l.b16 %v681
        %v704 = vunpack.c.h.b16 %v681
        %v705 = vunpack.c.l.b16 %v682
        %v706 = vunpack.c.h.b16 %v682
        %v707 = vunpack.c.l.b16 %v683
        %v708 = vunpack.c.h.b16 %v683
        %v709 = vunpack.c.l.b16 %v684
        %v710 = vunpack.c.h.b16 %v684
        %v711 = vunpack.c.l.b16 %v685
        %v712 = vunpack.c.h.b16 %v685
        %v713 = vpack.c.b16 %v697, %v695
        %v714 = vpack.c.b16 %v698, %v696
        %v715 = vpack.c.b16 %v701, %v699
        %v716 = vpack.c.b16 %v702, %v700
        %v717 = vpack.c.b16 %v705, %v703
        %v718 = vpack.c.b16 %v706, %v704
        %v719 = vpack.c.b16 %v709, %v707
        %v720 = vpack.c.b16 %v710, %v708
        %v721 = vpack.c.b16 %v711, %v711
        %v722 = vpack.c.b16 %v712, %v712
        %vm731 = vcmask 588800
        %v733 = vsel %vm731, %v676, 0
        %vm735 = vcmask 1043456
        %v737 = vsel %vm735, %v721, 0
        %v740 = vsel %vm735, %v722, 0
        %742 = vmatprep.subr.bf16.mxu0 %v714
        %743 = vmatpush1.bf16.msra.mxu0 %v713
        %744 = vmatprep.subr.bf16.mxu0 %v716
        %745 = vmatpush1.bf16.msra.mxu0 %v715
        %746 = vmatprep.subr.bf16.mxu0 %v718
        %747 = vmatpush1.bf16.msra.mxu0 %v717
        %748 = vmatprep.subr.bf16.mxu0 %v720
        %749 = vmatpush1.bf16.msra.mxu0 %v719
        %750 = vmatprep.subr.bf16.mxu0 %v740
        %751 = vmatpush1.bf16.msra.mxu0 %v737
        %752 = vmatprep.subr.bf16.mxu0 0
        %753 = vmatpush1.bf16.msra.mxu0 0
        %754 = vmatprep.subr.bf16.mxu0 0
        %755 = vmatpush1.bf16.msra.mxu0 0
        %756 = vmatprep.subr.bf16.mxu0 0
        %757 = vmatpush1.bf16.msra.mxu0 0
        %758 = vmatprep.subr.bf16.mxu0 0
        %759 = vmatpush1.bf16.msra.mxu0 0
        %760 = vmatprep.subr.bf16.mxu0 0
        %761 = vmatpush1.bf16.msra.mxu0 0
        %762 = vmatprep.subr.bf16.mxu0 0
        %763 = vmatpush1.bf16.msra.mxu0 0
        %764 = vmatprep.subr.bf16.mxu0 0
        %765 = vmatpush1.bf16.msra.mxu0 0
        %766 = vmatprep.subr.bf16.mxu0 0
        %767 = vmatpush1.bf16.msra.mxu0 0
        %768 = vmatprep.subr.bf16.mxu0 0
        %769 = vmatpush1.bf16.msra.mxu0 0
        %770 = vmatprep.subr.bf16.mxu0 0
        %771 = vmatpush1.bf16.msra.mxu0 0
        %772 = vmatprep.subr.bf16.mxu0 0
        %773 = vmatpush1.bf16.msra.mxu0 0
        %774 = vmatprep.mubr.bf16.mxu0 0
        %775 = vmatmul.mubr.bf16.gmra.mrb[0].mxu0 %v733
        %v776 = vpop.f32.mrb[0].mxu0
        %v777 = vadd.f32 0.0, %v776
        %v778 = vpop.f32.mrb[0].mxu0
        %v779 = vadd.f32 0.0, %v778
        %v780 = vpop.f32.mrb[0].mxu0
        %v781 = vpop.f32.mrb[0].mxu0
        %782 = vdwg.mxu0
        %v783 = vld [vmem:[%s240] sm:$0xff]
        %v784 = vld [vmem:[%s240 + $0x8] sm:$0xff]
        %v785 = vstv %s272
        %v786 = vmul.f32 %v785, %v777
        %v787 = vmul.f32 %v785, %v779
        %v788 = vadd.f32 %v783, %v786
        %v789 = vadd.f32 %v784, %v787
        %790 = vst [vmem:[%s268] sm:$0xff] %v788
        %791 = vst [vmem:[%s268 + $0x8] sm:$0xff] %v789
        %s792 = sand.u32 %s163, 1
        %s793 = scalar_lea.sflag [#allocation6], %s792
        %s794 = sand.u32 %s163, 1
        %s795 = smul.addr %s794, 16
        %s796 = scalar_lea.vmem [#allocation7], %s795
        // Predicated region
        $region49: #{tpu_custom_call.1} parent=43 // pred_check
          %p797 = pneg %p173
        $region50: #{tpu_custom_call.1} parent=43 // pred_check_branch
          %799 = sbr.rel (%p797) target = $region52
        $region51: #{tpu_custom_call.1} parent=43 // pred_region
          %s801 = ssub.s32 256, 256
          %802 = vsyncadd %s793, %s801
          %s803 = smul.addr %s24, 2
          %s804 = smul.addr %s803, 128
          %s805 = scalar_lea.hbm %s6, %s804
          %s807 = sshll.u32 %s796, 4
          %s808 = int_to_ptr.vmem [resolvable:$true] %s807
          %810 = dma.vmem_to_hbm [thread:$0]  %s808, 256, %s805, %s793
        $region52: #{tpu_custom_call.1} parent=43 // pred_fallthru
          _
      $region44: #{tpu_custom_call.1} parent=5 // pred_fallthru
        _
      %p811 = scmp.le.s32.totalorder 2, %s19
      // Predicated region
      $region53: #{tpu_custom_call.1} parent=5 // pred_check
        %p812 = pneg %p811
      $region54: #{tpu_custom_call.1} parent=5 // pred_check_branch
        %814 = sbr.rel (%p812) target = $region56
      $region55: #{tpu_custom_call.1} parent=5 // pred_region
        %s815 = ssub.s32 %s19, 2
        // Predicated region
        $region57: #{tpu_custom_call.1} parent=55 // pred_check
          %p816 = pneg %p179
        $region58: #{tpu_custom_call.1} parent=55 // pred_check_branch
          %818 = sbr.rel (%p816) target = $region60
        $region59: #{tpu_custom_call.1} parent=55 // pred_region
          %s819 = sand.u32 %s164, 1
          %s820 = scalar_lea.sflag [#allocation6], %s819
          %s821 = sand.u32 %s164, 1
          %s822 = smul.addr %s821, 16
          %s823 = scalar_lea.vmem [#allocation7], %s822
          %824 = dma.done %s820, 256
        $region60: #{tpu_custom_call.1} parent=55 // pred_fallthru
          _
      $region56: #{tpu_custom_call.1} parent=5 // pred_fallthru
        _
    $region6: #{tpu_custom_call.1} parent=1 // loop_footer
      %s23 = sadd.s32 1, %s19
    $region7: #{tpu_custom_call.1} parent=1 // loop_footer_branch
      %18 = sbr.rel target = $region3
    $region8: #{tpu_custom_call.1} parent=1 // loop_exit
      _
    %825 = vsyncpa [#allocation5], 1
    %s826 = scalar_lea.sflag [#allocation5], 1
    %827 = vsyncpa %s826, 1
    %828 = vsyncpa [#allocation6], 1
    %s829 = scalar_lea.sflag [#allocation6], 1
    %830 = vsyncpa %s829, 1

</llo_original>
